<compile_context>
chip_gen: v7x
topology: tpu7x:2x2x1
jax: 0.10.0
libtpu: 0.0.40
codegen_flags: <defaults>
</compile_context>

<pallas_src>
import functools
import math

import numpy as np
import jax
import jax.numpy as jnp
from jax.experimental import pallas as pl
from jax.experimental.pallas import tpu as pltpu

LANE = 128          # TPU lane width
SUBLANE = 8         # TPU sublane width (f32)


def _round_up(x, m):
    return (x + m - 1) // m * m


# ----------------------------- fused kernel ---------------------------------

def _feature_decoder_kernel(z_ref, w1_ref, b1_ref, w2_ref, b2_ref, o_ref, *,
                            neg_slope):
    """One row-tile of:  o = (leaky_relu(z @ w1 + b1)) @ w2 + b2.

    z_ref  : (TM, D)  input row tile (streams over the grid)
    w1_ref : (D, H)   bf16 fc1 weight   (resident: same block every step)
    b1_ref : (1, H)   f32  fc1 bias     (resident)
    w2_ref : (H, F)   bf16 fc2 weight   (resident)
    b2_ref : (1, F)   f32  fc2 bias     (resident)
    o_ref  : (TM, F)  output row tile
    """
    # fc1 on the MXU: bf16 operands, f32 accumulation; bias add in f32 (VPU).
    h = jnp.dot(z_ref[...].astype(jnp.bfloat16), w1_ref[...],
                preferred_element_type=jnp.float32) + b1_ref[...]
    # LeakyReLU(0.1): for 0 < slope < 1, max(h, slope*h) == leaky_relu(h).
    # Dropout = identity at inference.
    h = jnp.maximum(h, neg_slope * h)
    # fc2 on the MXU.
    out = jnp.dot(h.astype(jnp.bfloat16), w2_ref[...],
                  preferred_element_type=jnp.float32) + b2_ref[...]
    o_ref[...] = out.astype(o_ref.dtype)


# ----------------------------- tiling helper ---------------------------------

def _choose_row_tile_and_vmem(N, D, H, F, row_tile, in_bytes, out_bytes):
    """Pick the largest row tile that fits a conservative VMEM budget."""
    TM = max(SUBLANE, min(row_tile, _round_up(max(N, 1), SUBLANE)))
    TM = _round_up(TM, SUBLANE)

    def est(tm):
        stream = 2 * tm * D * in_bytes + 2 * tm * F * out_bytes  # dbl-buffered z/out tiles
        weights = 2 * (D * H * 2 + H * 4 + H * F * 2 + F * 4)    # conservatively x2
        interm = tm * H * (4 + 2)                                # f32 h + bf16 recast
        return stream + weights + interm

    budget = 40 * 1024 * 1024            # leaves headroom on v7x's 64 MiB VMEM
    while TM > SUBLANE and est(TM) > budget:
        TM = max(SUBLANE, _round_up(TM // 2, SUBLANE))

    vmem_limit = max(32 * 1024 * 1024, min(est(TM) + (8 << 20), 96 * 1024 * 1024))
    return TM, vmem_limit


# ----------------------------- wrapper ---------------------------------------

def feature_decoder_forward(z, prep, *, neg_slope=0.1, row_tile=1024,
                            out_dtype=jnp.float32):
    """Pallas implementation of FeatureDecoder.forward (eval mode).

    z:    (..., embed_dim), f32 or bf16 (passed through untouched to the kernel).
    prep: output of prepare_feature_decoder_params() (cached across calls).
    Returns (..., num_features) in `out_dtype` (f32 default matches PyTorch).
    """
    orig_shape = z.shape
    D = orig_shape[-1]
    z2 = z.reshape(-1, D)                # no dtype cast here (keep HBM stream minimal)
    N = z2.shape[0]

    w1, b1, w2, b2 = prep['w1'], prep['b1'], prep['w2'], prep['b2']
    H = w1.shape[1]                      # embed_dim // 2
    F = w2.shape[1]                      # num_features

    in_bytes = jnp.dtype(z2.dtype).itemsize
    out_bytes = jnp.dtype(out_dtype).itemsize
    TM, vmem_limit = _choose_row_tile_and_vmem(N, D, H, F, row_tile,
                                               in_bytes, out_bytes)
    grid = (pl.cdiv(N, TM),)             # ragged N: edge-block output writes are masked

    # Weights/biases are broadcast blocks (same block index every grid step ->
    # resident in VMEM).  Only single-buffer them when they are big enough to
    # threaten the v7x (64 MiB) VMEM budget; tiny weights keep the default.
    single_buffer_weights = (D * H * 2 + H * F * 2) > (20 << 20)

    def _resident_spec(shape):
        if single_buffer_weights:
            return pl.BlockSpec(shape, lambda i: (0, 0),
                                pipeline_mode=pl.Buffered(1))
        return pl.BlockSpec(shape, lambda i: (0, 0))

    out = pl.pallas_call(
        functools.partial(_feature_decoder_kernel, neg_slope=neg_slope),
        out_shape=jax.ShapeDtypeStruct((N, F), out_dtype),
        grid_spec=pltpu.PrefetchScalarGridSpec(
            num_scalar_prefetch=0,
            grid=grid,
            in_specs=[
                pl.BlockSpec((TM, D), lambda i: (i, 0)),   # z row tile (streams)
                _resident_spec((D, H)),                    # w1
                _resident_spec((1, H)),                    # b1
                _resident_spec((H, F)),                    # w2
                _resident_spec((1, F)),                    # b2
            ],
            out_specs=pl.BlockSpec((TM, F), lambda i: (i, 0)),
        ),
        compiler_params=pltpu.CompilerParams(
            # Row tiles are independent -> megacore sharding on v7x
            # (needs grid >= 2 steps to actually split across the two TCs).
            dimension_semantics=("parallel",),
            vmem_limit_bytes=vmem_limit,
        ),
    )(z2, w1, b1, w2, b2)

    return out.reshape(orig_shape[:-1] + (F,))


# ----------------------------- parameters ------------------------------------

def init_feature_decoder_params(key, embed_dim, num_features):
    """Matches FeatureDecoder.reset_parameters(): xavier_uniform_ weights, zero biases."""
    hidden = embed_dim // 2
    k1, k2 = jax.random.split(key)

    def xavier_uniform(k, fan_in, fan_out):
        bound = math.sqrt(6.0 / (fan_in + fan_out))
        return jax.random.uniform(k, (fan_in, fan_out), jnp.float32, -bound, bound)

    return {
        'w1': xavier_uniform(k1, embed_dim, hidden),
        'b1': jnp.zeros((hidden,), jnp.float32),
        'w2': xavier_uniform(k2, hidden, num_features),
        'b2': jnp.zeros((num_features,), jnp.float32),
    }


def prepare_feature_decoder_params(params):
    """One-time cast/reshape of parameters for the kernel (cache the result).

    Hoists the per-call weight cast/copy out of the forward: build bf16 weights
    and (1, dim) f32 biases once; the forward only streams the input rows.
    """
    return {
        'w1': params['w1'].astype(jnp.bfloat16),
        'b1': params['b1'].astype(jnp.float32).reshape(1, -1),
        'w2': params['w2'].astype(jnp.bfloat16),
        'b2': params['b2'].astype(jnp.float32).reshape(1, -1),
    }


# ----------------------------------- main -------------------------------------

if __name__ == "__main__":
    embed_dim = 32
    num_features = 4
    B, S = 2, 8                          # batch of node-embedding rows

    key = jax.random.PRNGKey(0)
    kp, kz = jax.random.split(key)
    params = init_feature_decoder_params(kp, embed_dim, num_features)
    prep = prepare_feature_decoder_params(params)        # built once, reused per call
    z = jax.random.normal(kz, (B, S, embed_dim), jnp.float32)

    out = feature_decoder_forward(z, prep)
    out = jax.block_until_ready(out)
    assert out.shape == (B, S, num_features)
    assert out.dtype == jnp.float32

    # Pure-JAX f32 reference (dropout = identity at inference); loose tolerance
    # because the kernel runs the matmuls with bf16 operands / f32 accumulation.
    z2 = z.reshape(-1, embed_dim)
    h_ref = z2 @ params['w1'] + params['b1']
    h_ref = jnp.where(h_ref > 0, h_ref, 0.1 * h_ref)
    ref = (h_ref @ params['w2'] + params['b2']).reshape(B, S, num_features)
    np.testing.assert_allclose(np.asarray(out), np.asarray(ref),
                               rtol=5e-2, atol=1e-1)

    print("KERNEL_OK")
</pallas_src>

<mosaic_0001>
module attributes {stable_mosaic.version = 11 : i64} {
  func.func @_feature_decoder_kernel(%arg0: i32, %arg1: memref<16x32xf32, #tpu.memory_space<vmem>>, %arg2: memref<32x16xbf16, #tpu.memory_space<vmem>>, %arg3: memref<1x16xf32, #tpu.memory_space<vmem>>, %arg4: memref<16x4xbf16, #tpu.memory_space<vmem>>, %arg5: memref<1x4xf32, #tpu.memory_space<vmem>>, %arg6: memref<16x4xf32, #tpu.memory_space<vmem>>) attributes {dimension_semantics = [#tpu.dimension_semantics<parallel>], iteration_bounds = array<i64: 1>, scalar_prefetch = 0 : i64, scratch_operands = 0 : i64, tpu.core_type = #tpu.core_type<tc>, window_params = [{transform_indices = @transform_0, window_bounds = array<i64: 16, 32>}, {pipeline_mode = #tpu.pipeline_mode<synchronous>, transform_indices = @transform_1, window_bounds = array<i64: 32, 16>}, {pipeline_mode = #tpu.pipeline_mode<synchronous>, transform_indices = @transform_2, window_bounds = array<i64: 1, 16>}, {pipeline_mode = #tpu.pipeline_mode<synchronous>, transform_indices = @transform_3, window_bounds = array<i64: 16, 4>}, {pipeline_mode = #tpu.pipeline_mode<synchronous>, transform_indices = @transform_4, window_bounds = array<i64: 1, 4>}, {transform_indices = @transform_5, window_bounds = array<i64: 16, 4>}]} {
    %c0 = arith.constant 0 : index
    %c0_0 = arith.constant 0 : index
    %0 = vector.load %arg1[%c0, %c0_0] : memref<16x32xf32, #tpu.memory_space<vmem>>, vector<16x32xf32>
    %1 = arith.truncf %0 : vector<16x32xf32> to vector<16x32xbf16>
    %c0_1 = arith.constant 0 : index
    %c0_2 = arith.constant 0 : index
    %2 = vector.load %arg2[%c0_1, %c0_2] : memref<32x16xbf16, #tpu.memory_space<vmem>>, vector<32x16xbf16>
    %cst = arith.constant dense<0.000000e+00> : vector<16x16xf32>
    %3 = tpu.matmul %1, %2, %cst {dimension_numbers = #tpu.dot_dimension_numbers<[1], [0], [0], [1], [0, 0, 1, 1], [], []>} : vector<16x32xbf16>, vector<32x16xbf16>, vector<16x16xf32> -> vector<16x16xf32>
    %c0_3 = arith.constant 0 : index
    %c0_4 = arith.constant 0 : index
    %4 = vector.load %arg3[%c0_3, %c0_4] : memref<1x16xf32, #tpu.memory_space<vmem>>, vector<1x16xf32>
    %5 = vector.broadcast %4 : vector<1x16xf32> to vector<16x16xf32>
    %6 = arith.addf %3, %5 : vector<16x16xf32>
    %cst_5 = arith.constant 1.000000e-01 : f32
    %7 = vector.broadcast %cst_5 : f32 to vector<16x16xf32>
    %8 = arith.mulf %7, %6 : vector<16x16xf32>
    %9 = arith.maximumf %6, %8 : vector<16x16xf32>
    %10 = arith.truncf %9 : vector<16x16xf32> to vector<16x16xbf16>
    %c0_6 = arith.constant 0 : index
    %c0_7 = arith.constant 0 : index
    %11 = vector.load %arg4[%c0_6, %c0_7] : memref<16x4xbf16, #tpu.memory_space<vmem>>, vector<16x4xbf16>
    %cst_8 = arith.constant dense<0.000000e+00> : vector<16x4xf32>
    %12 = tpu.matmul %10, %11, %cst_8 {dimension_numbers = #tpu.dot_dimension_numbers<[1], [0], [0], [1], [0, 0, 1, 1], [], []>} : vector<16x16xbf16>, vector<16x4xbf16>, vector<16x4xf32> -> vector<16x4xf32>
    %c0_9 = arith.constant 0 : index
    %c0_10 = arith.constant 0 : index
    %13 = vector.load %arg5[%c0_9, %c0_10] : memref<1x4xf32, #tpu.memory_space<vmem>>, vector<1x4xf32>
    %14 = vector.broadcast %13 : vector<1x4xf32> to vector<16x4xf32>
    %15 = arith.addf %12, %14 : vector<16x4xf32>
    %c0_11 = arith.constant 0 : index
    %c0_12 = arith.constant 0 : index
    %16 = vector.load %arg6[%c0_11, %c0_12] : memref<16x4xf32, #tpu.memory_space<vmem>>, vector<16x4xf32>
    tpu.vector_store %arg6[%c0_11, %c0_12], %15 {strides = array<i32>} : memref<16x4xf32, #tpu.memory_space<vmem>>, vector<16x4xf32>,
    return
  }
  func.func @transform_0(%arg0: i32) -> (i32, i32) {
    %c0_i32 = arith.constant 0 : i32
    %c0_i32_0 = arith.constant 0 : i32
    return %arg0, %c0_i32 : i32, i32
  }
  func.func @transform_1(%arg0: i32) -> (i32, i32) {
    %c0_i32 = arith.constant 0 : i32
    %c0_i32_0 = arith.constant 0 : i32
    %c0_i32_1 = arith.constant 0 : i32
    return %c0_i32, %c0_i32_0 : i32, i32
  }
  func.func @transform_2(%arg0: i32) -> (i32, i32) {
    %c0_i32 = arith.constant 0 : i32
    %c0_i32_0 = arith.constant 0 : i32
    %c0_i32_1 = arith.constant 0 : i32
    return %c0_i32, %c0_i32_0 : i32, i32
  }
  func.func @transform_3(%arg0: i32) -> (i32, i32) {
    %c0_i32 = arith.constant 0 : i32
    %c0_i32_0 = arith.constant 0 : i32
    %c0_i32_1 = arith.constant 0 : i32
    return %c0_i32, %c0_i32_0 : i32, i32
  }
  func.func @transform_4(%arg0: i32) -> (i32, i32) {
    %c0_i32 = arith.constant 0 : i32
    %c0_i32_0 = arith.constant 0 : i32
    %c0_i32_1 = arith.constant 0 : i32
    return %c0_i32, %c0_i32_0 : i32, i32
  }
  func.func @transform_5(%arg0: i32) -> (i32, i32) {
    %c0_i32 = arith.constant 0 : i32
    %c0_i32_0 = arith.constant 0 : i32
    return %arg0, %c0_i32 : i32, i32
  }
}

</mosaic_0001>

<llo_original>
// kernel: tpu_custom_call.1
$region0: #{tpu_custom_call.1}
  #allocation0 [shape = 'u32[]', space=smem, size = 0x4, offset = 0x4, fixed_abs, tag = 'smem constant byte address 0x4 - core index']
  #allocation1 [shape = 'u32[144,128]{1,0:T(1,128)}', space=vmem, size = 0x12000, scoped, tag = 'internal scratch']
  %s0 = inlined_call_operand.vmem [shape: f32[16,32], index: 0, kind: input, shape index: {}]
  %s1 = inlined_call_operand.vmem [shape: bf16[32,16], index: 1, kind: input, shape index: {}]
  %s2 = inlined_call_operand.vmem [shape: f32[1,16], index: 2, kind: input, shape index: {}]
  %s3 = inlined_call_operand.vmem [shape: bf16[16,4], index: 3, kind: input, shape index: {}]
  %s4 = inlined_call_operand.vmem [shape: f32[1,4], index: 4, kind: input, shape index: {}]
  %s5 = inlined_call_operand.vmem [shape: f32[16,4], index: 5, kind: output, shape index: {}]
  %s6 = sld [smem:[#allocation0]]
  $region30: #{tpu_custom_call.1} parent=0
    _
  %s8 = ssub.s32 1, %s6
  %s9 = scalar_select 0, %s8, %s6
  // Predicated region
  $region2: #{tpu_custom_call.1} parent=0 // pred_check
    _
  $region3: #{tpu_custom_call.1} parent=0 // pred_check_branch
    %11 = sbr.rel (0) target = $region5
  $region4: #{tpu_custom_call.1} parent=0 // pred_region
    _
  $region5: #{tpu_custom_call.1} parent=0 // pred_fallthru
    _
  // Predicated region
  $region6: #{tpu_custom_call.1} parent=0 // pred_check
    _
  $region7: #{tpu_custom_call.1} parent=0 // pred_check_branch
    %13 = sbr.rel (0) target = $region9
  $region8: #{tpu_custom_call.1} parent=0 // pred_region
    _
  $region9: #{tpu_custom_call.1} parent=0 // pred_fallthru
    _
  // Predicated region
  $region10: #{tpu_custom_call.1} parent=0 // pred_check
    _
  $region11: #{tpu_custom_call.1} parent=0 // pred_check_branch
    %15 = sbr.rel (0) target = $region13
  $region12: #{tpu_custom_call.1} parent=0 // pred_region
    _
  $region13: #{tpu_custom_call.1} parent=0 // pred_fallthru
    _
  // Predicated region
  $region14: #{tpu_custom_call.1} parent=0 // pred_check
    _
  $region15: #{tpu_custom_call.1} parent=0 // pred_check_branch
    %17 = sbr.rel (0) target = $region17
  $region16: #{tpu_custom_call.1} parent=0 // pred_region
    _
  $region17: #{tpu_custom_call.1} parent=0 // pred_fallthru
    _
  // Predicated region
  $region18: #{tpu_custom_call.1} parent=0 // pred_check
    _
  $region19: #{tpu_custom_call.1} parent=0 // pred_check_branch
    %19 = sbr.rel (0) target = $region21
  $region20: #{tpu_custom_call.1} parent=0 // pred_region
    _
  $region21: #{tpu_custom_call.1} parent=0 // pred_fallthru
    _
  %v21 = vld [vmem:[%s0] sm:$0xff]
  %v22 = vld [vmem:[%s0 + $0x8] sm:$0xff]
  %v23 = vpack.c.bf16 %v22, %v21
  %v24 = vld [vmem:[%s1] sm:$0xf]
  %v25 = vld [vmem:[%s1 + $0x4] sm:$0xf]
  %v26 = vld [vmem:[%s1 + $0x8] sm:$0xf]
  %v27 = vld [vmem:[%s1 + $0xc] sm:$0xf]
  %v28 = vld [vmem:[%s2] sm:$0x1]
  %v30 = vlaneseq
  %v31 = vshrl.u32 %v30, 7
  %v32 = vsub.s32 0, %v31
  %v33 = vrot.slane %v28, %v32
  %v39 = vunpack.c.l.b16 %v24
  %v40 = vunpack.c.l.b16 %v25
  %v41 = vunpack.c.l.b16 %v26
  %v42 = vunpack.c.l.b16 %v27
  %v43 = vpack.c.b16 %v40, %v39
  %v44 = vpack.c.b16 %v42, %v41
  %vm47 = vcmask 261120
  %v49 = vsel %vm47, %v23, 0
  %51 = vmatprep.subr.bf16.mxu0 0
  %52 = vmatpush1.bf16.msra.mxu0 %v43
  %53 = vmatprep.subr.bf16.mxu0 0
  %54 = vmatpush1.bf16.msra.mxu0 %v44
  %55 = vmatprep.subr.bf16.mxu0 0
  %56 = vmatpush1.bf16.msra.mxu0 0
  %57 = vmatprep.subr.bf16.mxu0 0
  %58 = vmatpush1.bf16.msra.mxu0 0
  %59 = vmatprep.subr.bf16.mxu0 0
  %60 = vmatpush1.bf16.msra.mxu0 0
  %61 = vmatprep.subr.bf16.mxu0 0
  %62 = vmatpush1.bf16.msra.mxu0 0
  %63 = vmatprep.subr.bf16.mxu0 0
  %64 = vmatpush1.bf16.msra.mxu0 0
  %65 = vmatprep.subr.bf16.mxu0 0
  %66 = vmatpush1.bf16.msra.mxu0 0
  %67 = vmatprep.subr.bf16.mxu0 0
  %68 = vmatpush1.bf16.msra.mxu0 0
  %69 = vmatprep.subr.bf16.mxu0 0
  %70 = vmatpush1.bf16.msra.mxu0 0
  %71 = vmatprep.subr.bf16.mxu0 0
  %72 = vmatpush1.bf16.msra.mxu0 0
  %73 = vmatprep.subr.bf16.mxu0 0
  %74 = vmatpush1.bf16.msra.mxu0 0
  %75 = vmatprep.subr.bf16.mxu0 0
  %76 = vmatpush1.bf16.msra.mxu0 0
  %77 = vmatprep.subr.bf16.mxu0 0
  %78 = vmatpush1.bf16.msra.mxu0 0
  %79 = vmatprep.subr.bf16.mxu0 0
  %80 = vmatpush1.bf16.msra.mxu0 0
  %81 = vmatprep.subr.bf16.mxu0 0
  %82 = vmatpush1.bf16.msra.mxu0 0
  %83 = vmatprep.mubr.bf16.mxu0 0
  %84 = vmatmul.mubr.bf16.gmra.mrb[0].mxu0 %v49
  %v85 = vpop.f32.mrb[0].mxu0
  %v86 = vadd.f32 %v33, %v85
  %v87 = vpop.f32.mrb[0].mxu0
  %v88 = vpop.f32.mrb[0].mxu0
  %v89 = vadd.f32 %v33, %v88
  %v90 = vpop.f32.mrb[0].mxu0
  %91 = vdwg.mxu0
  %v92 = vmul.f32 %v86, 0.1
  %v93 = vmul.f32 %v89, 0.1
  %v94 = vmax.f32 %v86, %v92
  %v95 = vmax.f32 %v89, %v93
  %v96 = vpack.c.bf16 %v95, %v94
  %v97 = vld [vmem:[%s3] sm:$0xf]
  %v98 = vld [vmem:[%s3 + $0x4] sm:$0xf]
  %v99 = vld [vmem:[%s4] sm:$0x1]
  %v101 = vlaneseq
  %v102 = vshrl.u32 %v101, 7
  %v103 = vsub.s32 0, %v102
  %v104 = vrot.slane %v99, %v103
  %v108 = vunpack.c.l.b16 %v97
  %v109 = vunpack.c.l.b16 %v98
  %v110 = vpack.c.b16 %v109, %v108
  %vm112 = vcmask 130048
  %v114 = vsel %vm112, %v96, 0
  %116 = vmatprep.subr.bf16.mxu0 0
  %117 = vmatpush1.bf16.msra.mxu0 %v110
  %118 = vmatprep.subr.bf16.mxu0 0
  %119 = vmatpush1.bf16.msra.mxu0 0
  %120 = vmatprep.subr.bf16.mxu0 0
  %121 = vmatpush1.bf16.msra.mxu0 0
  %122 = vmatprep.subr.bf16.mxu0 0
  %123 = vmatpush1.bf16.msra.mxu0 0
  %124 = vmatprep.subr.bf16.mxu0 0
  %125 = vmatpush1.bf16.msra.mxu0 0
  %126 = vmatprep.subr.bf16.mxu0 0
  %127 = vmatpush1.bf16.msra.mxu0 0
  %128 = vmatprep.subr.bf16.mxu0 0
  %129 = vmatpush1.bf16.msra.mxu0 0
  %130 = vmatprep.subr.bf16.mxu0 0
  %131 = vmatpush1.bf16.msra.mxu0 0
  %132 = vmatprep.subr.bf16.mxu0 0
  %133 = vmatpush1.bf16.msra.mxu0 0
  %134 = vmatprep.subr.bf16.mxu0 0
  %135 = vmatpush1.bf16.msra.mxu0 0
  %136 = vmatprep.subr.bf16.mxu0 0
  %137 = vmatpush1.bf16.msra.mxu0 0
  %138 = vmatprep.subr.bf16.mxu0 0
  %139 = vmatpush1.bf16.msra.mxu0 0
  %140 = vmatprep.subr.bf16.mxu0 0
  %141 = vmatpush1.bf16.msra.mxu0 0
  %142 = vmatprep.subr.bf16.mxu0 0
  %143 = vmatpush1.bf16.msra.mxu0 0
  %144 = vmatprep.subr.bf16.mxu0 0
  %145 = vmatpush1.bf16.msra.mxu0 0
  %146 = vmatprep.subr.bf16.mxu0 0
  %147 = vmatpush1.bf16.msra.mxu0 0
  %148 = vmatprep.mubr.bf16.mxu0 0
  %149 = vmatmul.mubr.bf16.gmra.mrb[0].mxu0 %v114
  %v150 = vpop.f32.mrb[0].mxu0
  %v151 = vadd.f32 %v104, %v150
  %v152 = vpop.f32.mrb[0].mxu0
  %v153 = vpop.f32.mrb[0].mxu0
  %v154 = vadd.f32 %v104, %v153
  %v155 = vpop.f32.mrb[0].mxu0
  %156 = vdwg.mxu0
  %vm157 = vcmask 31744
  %158 = vst.msk [vmem:[%s5] sm:$0xff] %vm157, %v151
  %159 = vst.msk [vmem:[%s5 + $0x8] sm:$0xff] %vm157, %v154
  // Predicated region
  $region22: #{tpu_custom_call.1} parent=0 // pred_check
    _
  $region23: #{tpu_custom_call.1} parent=0 // pred_check_branch
    %161 = sbr.rel (0) target = $region25
  $region24: #{tpu_custom_call.1} parent=0 // pred_region
    _
  $region25: #{tpu_custom_call.1} parent=0 // pred_fallthru
    _
  // Predicated region
  $region26: #{tpu_custom_call.1} parent=0 // pred_check
    _
  $region27: #{tpu_custom_call.1} parent=0 // pred_check_branch
    %163 = sbr.rel (0) target = $region29
  $region28: #{tpu_custom_call.1} parent=0 // pred_region
    _
  $region29: #{tpu_custom_call.1} parent=0 // pred_fallthru
    _

</llo_original>
